<compile_context>
chip_gen: v5e
topology: v5e:2x2
jax: 0.10.0
libtpu: 0.0.40
codegen_flags: <defaults>
</compile_context>

<pallas_src>
import functools
import math

import jax
import jax.numpy as jnp
from jax.experimental import pallas as pl
from jax.experimental.pallas import tpu as pltpu

VMEM_SPEC = pl.BlockSpec(memory_space=pltpu.MemorySpace.VMEM)

# Stay under every generation's default scoped VMEM (v5e 16 MiB) for the fused
# whole-array GCNII kernel; beyond this, switch to the row-tiled per-layer path.
_FUSED_GCN_VMEM_BUDGET = 12 * 1024 * 1024
# Never request v7x's full 64 MiB of physical VMEM.
_VMEM_CAP = 48 * 1024 * 1024


# ------------------------------ small helpers -------------------------------

def _round_up(x, m):
    return ((x + m - 1) // m) * m


def _pick_tile(n, pref, align):
    """Tile size: `pref` when n is large, otherwise the (aligned) full extent."""
    return pref if n >= pref else _round_up(n, align)


def _pad2(x, rows, cols):
    r, c = x.shape
    if r == rows and c == cols:
        return x
    return jnp.pad(x, ((0, rows - r), (0, cols - c)))


# ----------------------------- Pallas kernels ------------------------------

def _fc_relu_kernel(x_ref, w_ref, b_ref, o_ref):
    y = jnp.dot(x_ref[...].astype(jnp.bfloat16), w_ref[...],
                preferred_element_type=jnp.float32)
    o_ref[...] = jnp.maximum(y + b_ref[...], 0.0)


def fc_relu(x, w_bf16, b):
    """ReLU(x @ W + b); W pre-cast to bf16, output lane-dense (N, D_PAD)."""
    n, in_dim = x.shape
    d = w_bf16.shape[1]
    tm = _pick_tile(n, 1024, 8)
    n_p = _round_up(n, tm)
    x_p = _pad2(x, n_p, in_dim)
    out = pl.pallas_call(
        _fc_relu_kernel,
        out_shape=jax.ShapeDtypeStruct((n_p, d), jnp.float32),
        grid=(n_p // tm,),
        in_specs=[pl.BlockSpec((tm, in_dim), lambda i: (i, 0)),
                  pl.BlockSpec((in_dim, d), lambda i: (0, 0)),
                  pl.BlockSpec((1, d), lambda i: (0, 0))],
        out_specs=pl.BlockSpec((tm, d), lambda i: (i, 0)),
        compiler_params=pltpu.CompilerParams(dimension_semantics=("parallel",)),
    )(x_p, w_bf16, b.reshape(1, d))
    return out[:n]


def _proj_scores_kernel(w_ref, b_ref, h_ref, o_ref):
    # (1, D) . (tn, D) contracting the last dims -> (1, tn): lane-dense scores,
    # no in-kernel transpose of h.
    z = jax.lax.dot_general(w_ref[...], h_ref[...],
                            (((1,), (1,)), ((), ())),
                            preferred_element_type=jnp.float32)
    z = z + b_ref[...]
    # Exact EUP reciprocal: scores feed top_k ranking + feature scaling.
    o_ref[...] = pl.reciprocal(1.0 + jnp.exp(-z), approx=False)


def proj_scores(h, w_row, b):
    n, d = h.shape
    tn = _pick_tile(n, 512, 128)
    n_p = _round_up(n, tn)
    h_p = _pad2(h, n_p, d)
    out = pl.pallas_call(
        _proj_scores_kernel,
        out_shape=jax.ShapeDtypeStruct((1, n_p), jnp.float32),
        grid=(n_p // tn,),
        in_specs=[pl.BlockSpec((1, d), lambda i: (0, 0)),
                  pl.BlockSpec((1, 1), lambda i: (0, 0)),
                  pl.BlockSpec((tn, d), lambda i: (i, 0))],
        out_specs=pl.BlockSpec((1, tn), lambda i: (0, i)),
        compiler_params=pltpu.CompilerParams(dimension_semantics=("parallel",)),
    )(w_row, b.reshape(1, 1), h_p)
    return out[0, :n]


def _adj_sq_kernel(ar_ref, a_ref, o_ref, acc_ref):
    @pl.when(pl.program_id(2) == 0)
    def _():
        acc_ref[...] = jnp.zeros_like(acc_ref)

    # Operands are pre-thresholded 0/1 bf16 in HBM: no in-kernel casts.
    acc_ref[...] += jnp.dot(ar_ref[...], a_ref[...],
                            preferred_element_type=jnp.float32)

    @pl.when(pl.program_id(2) == pl.num_programs(2) - 1)
    def _():
        o_ref[...] = (acc_ref[...] > 0.0).astype(jnp.bfloat16)


def adj_sq_rows(a_rows, a):
    """((bool g)[idx,:] @ (bool g)) > 0 as bf16 — (K, N) instead of (N, N)."""
    kk, n = a_rows.shape
    tkr = _pick_tile(kk, 256, 8)       # K rows ("parallel")
    tnk = _pick_tile(n, 512, 128)      # output columns ("parallel") + reduction tile
    kk_p = _round_up(kk, tkr)
    n_p = _round_up(n, tnk)
    a_rows_p = _pad2(a_rows, kk_p, n_p)
    a_p = _pad2(a, n_p, n_p)
    out = pl.pallas_call(
        _adj_sq_kernel,
        out_shape=jax.ShapeDtypeStruct((kk_p, n_p), jnp.bfloat16),
        grid=(kk_p // tkr, n_p // tnk, n_p // tnk),          # reduction axis last
        in_specs=[pl.BlockSpec((tkr, tnk), lambda r, j, k: (r, k)),
                  pl.BlockSpec((tnk, tnk), lambda r, j, k: (k, j))],
        out_specs=pl.BlockSpec((tkr, tnk), lambda r, j, k: (r, j)),
        scratch_shapes=[pltpu.VMEM((tkr, tnk), jnp.float32)],
        compiler_params=pltpu.CompilerParams(
            dimension_semantics=("parallel", "parallel", "arbitrary")),
    )(a_rows_p, a_p)
    return out[:kk, :n]


def _gcnii3_fused_kernel(g_ref, h_ref, h0_ref, w_ref, o_ref, *, thetas, alpha):
    # All three GCNII layers fused: adjacency / h0 / weights stay VMEM-resident
    # and the intermediate h never leaves the kernel.
    g = g_ref[...]                       # bf16 adjacency (0/1 exact)
    h0 = h0_ref[...]
    h0_b = h0.astype(jnp.bfloat16)
    h = h_ref[...]
    for j, theta in enumerate(thetas):   # static unroll
        c_hi = (1.0 - theta) * (1.0 - alpha)
        c_h0 = (1.0 - theta) * alpha
        hi = jnp.dot(g, h.astype(jnp.bfloat16), preferred_element_type=jnp.float32)
        # support = concat([hi, h0], 1): one 256-deep contraction (full MXU depth
        # on v6e/v7x) instead of two 128-deep matmuls.
        support = jnp.concatenate([hi.astype(jnp.bfloat16), h0_b], axis=1)
        sw = jnp.dot(support, w_ref[j], preferred_element_type=jnp.float32)
        # folded epilogue of: h_temp = θ·sw + (1-θ)((1-α)hi + α·h0) + h ; h = relu(h + h_temp)
        h = jnp.maximum(2.0 * h + theta * sw + c_hi * hi + c_h0 * h0, 0.0)
    o_ref[...] = h


def _gcnii_layer_kernel(g_ref, hb_ref, h_ref, h0_ref, w_ref, o_ref, *, theta, alpha):
    # Row-tiled single GCNII layer: g_ref (tm, Kp) bf16 rows, hb_ref (Kp, D) bf16
    # full h (resident), h_ref/h0_ref (tm, D) f32 rows, w_ref (2D, D) bf16.
    c_hi = (1.0 - theta) * (1.0 - alpha)
    c_h0 = (1.0 - theta) * alpha
    hi = jnp.dot(g_ref[...], hb_ref[...], preferred_element_type=jnp.float32)
    h0 = h0_ref[...]
    support = jnp.concatenate([hi.astype(jnp.bfloat16), h0.astype(jnp.bfloat16)], axis=1)
    sw = jnp.dot(support, w_ref[...], preferred_element_type=jnp.float32)
    o_ref[...] = jnp.maximum(2.0 * h_ref[...] + theta * sw + c_hi * hi + c_h0 * h0, 0.0)


def _gcnii3_fused(g_bf, h, h0, w_stack, *, thetas, alpha):
    kk, d = h.shape
    kern = functools.partial(_gcnii3_fused_kernel, thetas=thetas, alpha=float(alpha))
    return pl.pallas_call(
        kern,
        out_shape=jax.ShapeDtypeStruct((kk, d), jnp.float32),
        in_specs=[VMEM_SPEC] * 4,
        out_specs=VMEM_SPEC,
    )(g_bf, h, h0, w_stack)


def _gcnii3_tiled(g_bf, h, h0, w_stack, *, thetas, alpha):
    # Per-layer row-tiled fallback for graphs whose K x K adjacency does not fit
    # comfortably in VMEM (v7x 64 MiB part); "parallel" row axis => 2-TC sharding.
    kk, d = h.shape
    kp = _round_up(kk, 128)
    tm = 256 if kp >= 256 else kp
    kp = _round_up(kp, tm)

    g_p = _pad2(g_bf, kp, kp)
    h_p = _pad2(h, kp, d)
    h0_p = _pad2(h0, kp, d)

    blk_bytes = (tm * kp * 2 * 2          # adjacency row block (bf16, double-buffered)
                 + kp * d * 2 * 2         # full h (bf16)
                 + 3 * tm * d * 4 * 2     # h / h0 / out row blocks (f32)
                 + 2 * d * d * 2 * 2)     # layer weight (bf16)
    cp = {"dimension_semantics": ("parallel",)}
    if blk_bytes > 12 * 1024 * 1024:
        cp["vmem_limit_bytes"] = min(_round_up(2 * blk_bytes, 1 << 20), _VMEM_CAP)
    compiler_params = pltpu.CompilerParams(**cp)

    grid = (kp // tm,)
    for j, theta in enumerate(thetas):
        kern = functools.partial(_gcnii_layer_kernel, theta=float(theta), alpha=float(alpha))
        h_bf = h_p.astype(jnp.bfloat16)   # MXU rhs; halves the resident full-h copy
        h_p = pl.pallas_call(
            kern,
            out_shape=jax.ShapeDtypeStruct((kp, d), jnp.float32),
            grid=grid,
            in_specs=[pl.BlockSpec((tm, kp), lambda i: (i, 0)),     # adjacency rows
                      pl.BlockSpec((kp, d), lambda i: (0, 0)),      # full h (bf16)
                      pl.BlockSpec((tm, d), lambda i: (i, 0)),      # h rows (f32)
                      pl.BlockSpec((tm, d), lambda i: (i, 0)),      # h0 rows (f32)
                      pl.BlockSpec((2 * d, d), lambda i: (0, 0))],  # layer weight
            out_specs=pl.BlockSpec((tm, d), lambda i: (i, 0)),
            compiler_params=compiler_params,
        )(g_p, h_bf, h_p, h0_p, w_stack[j])
    return h_p[:kk]


def gcnii3_relu(g_bf, h, h0, w_stack, *, thetas, alpha, force_tiled=False):
    kk, d = h.shape
    fused_bytes = (kk * kk * 2            # adjacency (bf16)
                   + 3 * kk * d * 4       # h, h0, out (f32)
                   + 3 * kk * d * 4       # hi / sw / support temporaries (generous)
                   + w_stack.size * 2)    # stacked weights (bf16)
    if force_tiled or fused_bytes > _FUSED_GCN_VMEM_BUDGET:
        return _gcnii3_tiled(g_bf, h, h0, w_stack, thetas=thetas, alpha=alpha)
    return _gcnii3_fused(g_bf, h, h0, w_stack, thetas=thetas, alpha=alpha)


def _max_kernel(*refs):
    o_ref = refs[-1]
    m = refs[0][...]
    for r in refs[1:-1]:
        m = jnp.maximum(m, r[...])
    o_ref[...] = m


def max_readout(hs):
    """Element-wise max over the per-pool h arrays, no (P, N, D) stack."""
    n, d = hs[0].shape
    tm = _pick_tile(n, 1024, 8)
    n_p = _round_up(n, tm)
    hs_p = [_pad2(h, n_p, d) for h in hs]
    spec = pl.BlockSpec((tm, d), lambda i: (i, 0))
    out = pl.pallas_call(
        _max_kernel,
        out_shape=jax.ShapeDtypeStruct((n_p, d), jnp.float32),
        grid=(n_p // tm,),
        in_specs=[spec] * len(hs_p),
        out_specs=spec,
        compiler_params=pltpu.CompilerParams(dimension_semantics=("parallel",)),
    )(*hs_p)
    return out[:n]


# ------------------------------- params -------------------------------------

def init_params(key, in_dim, dim, n_pools):
    d_pad = _round_up(dim, 128)           # lane-dense feature width
    keys = jax.random.split(key, 2 + 3 + 2 * n_pools)
    it = iter(range(len(keys)))

    stdv_fc = 1.0 / math.sqrt(in_dim)
    fc_w = jax.random.uniform(keys[next(it)], (in_dim, dim), jnp.float32, -stdv_fc, stdv_fc)
    fc_b = jax.random.uniform(keys[next(it)], (dim,), jnp.float32, -stdv_fc, stdv_fc)

    stdv_g = 1.0 / math.sqrt(dim)
    gcn_w = []
    for _ in range(3):
        w = jax.random.uniform(keys[next(it)], (2 * dim, dim), jnp.float32, -stdv_g, stdv_g)
        w1 = jnp.pad(w[:dim], ((0, d_pad - dim), (0, d_pad - dim)))
        w2 = jnp.pad(w[dim:], ((0, d_pad - dim), (0, d_pad - dim)))
        gcn_w.append(jnp.concatenate([w1, w2], axis=0))       # (2*d_pad, d_pad)

    stdv_p = 1.0 / math.sqrt(dim)
    proj_w, proj_b = [], []
    for _ in range(n_pools):
        pw = jax.random.uniform(keys[next(it)], (dim,), jnp.float32, -stdv_p, stdv_p)
        proj_b.append(jax.random.uniform(keys[next(it)], (1,), jnp.float32, -stdv_p, stdv_p))
        proj_w.append(jnp.pad(pw, (0, d_pad - dim)).reshape(1, d_pad))

    return {
        "dim": dim,
        "d_pad": d_pad,
        # zero-padded + pre-cast to bf16 (MXU-native); pads keep features exact 0
        "fc_w": jnp.pad(fc_w, ((0, 0), (0, d_pad - dim))).astype(jnp.bfloat16),
        "fc_b": jnp.pad(fc_b, (0, d_pad - dim)),
        "gcn_w": jnp.stack(gcn_w).astype(jnp.bfloat16),        # (3, 2*d_pad, d_pad)
        "proj_w": proj_w,                                      # f32 (score fidelity)
        "proj_b": proj_b,
    }


# ------------------------------- forward -------------------------------------

def subgraphnet_forward(feat, edge, params, ks, alpha, lamda, force_tiled_gcn=False):
    n = edge.shape[0]
    dim = params["dim"]
    d_pad = params["d_pad"]

    org_h = fc_relu(feat, params["fc_w"], params["fc_b"])       # ReLU(fc(feat)), (N, D_PAD)
    org_g_bf = edge.astype(jnp.bfloat16)                        # adjacency for GCNII (k == 1)
    org_g_bool = (edge != 0).astype(jnp.bfloat16)               # pre-thresholded once, bf16

    thetas = tuple(math.log(lamda / (j + 1) + 1.0) for j in range(3))

    hs = []
    for i, k in enumerate(ks):
        if k != 1:
            # ---- Pool ---- (drop_p = 0 -> identity dropout)
            scores = proj_scores(org_h, params["proj_w"][i], params["proj_b"][i])   # (N,)
            kcount = max(2, int(k * n))
            # TODO(synk): top_k + row/col gathers + unpool scatter are data-dependent;
            # kept as XLA glue.  Fusing the idx row-gather into adj_sq_rows would need a
            # per-row pl.Element gather (serializes the MXU) or a symmetry guarantee for
            # the a_rows @ a_rows.T shortcut, so it is intentionally not done here.
            values, idx = jax.lax.top_k(scores, kcount)
            h = org_h[idx, :] * values[:, None]
            a_rows = org_g_bool[idx, :]                          # (K, N) bf16
            g = adj_sq_rows(a_rows, org_g_bool)[:, idx]          # (K, K) bf16
        else:
            g = org_g_bf
            h = org_h
            idx = None
        h = gcnii3_relu(g, h, h, params["gcn_w"], thetas=thetas, alpha=alpha,
                        force_tiled=force_tiled_gcn)
        if k != 1:
            # ---- Unpool ----
            h = jnp.zeros((n, d_pad), h.dtype).at[idx].set(h)
        hs.append(h)

    # final: h = max over hs (last h equals hs[-1], so this matches the torch loop)
    h_max = max_readout(hs)
    return h_max[:, :dim]                                       # strip lane padding


# --------------------------------- main -------------------------------------

if __name__ == "__main__":
    N, IN_DIM, DIM = 128, 16, 32
    KS = (0.5, 1.0)
    ALPHA, LAMDA = 0.1, 0.5

    key = jax.random.PRNGKey(0)
    k_feat, k_edge, k_par = jax.random.split(key, 3)

    feat = jax.random.normal(k_feat, (N, IN_DIM), jnp.float32)
    # symmetric 0/1 adjacency with self-loops
    a = (jax.random.uniform(k_edge, (N, N)) < 0.1).astype(jnp.float32)
    edge = jnp.clip(a + a.T + jnp.eye(N, dtype=jnp.float32), 0.0, 1.0)

    params = init_params(k_par, IN_DIM, DIM, n_pools=len(KS))

    out = subgraphnet_forward(feat, edge, params, KS, ALPHA, LAMDA)
    out = jax.block_until_ready(out)
    assert out.shape == (N, DIM)

    # Exercise the row-tiled GCNII fallback path too and check it agrees with
    # the fused path (same bf16 MXU numerics, different tiling).
    out_tiled = subgraphnet_forward(feat, edge, params, KS, ALPHA, LAMDA,
                                    force_tiled_gcn=True)
    out_tiled = jax.block_until_ready(out_tiled)
    assert jnp.allclose(out, out_tiled, rtol=1e-3, atol=1e-3)

    print("KERNEL_OK")
</pallas_src>

<mosaic_0001>
module attributes {stable_mosaic.version = 11 : i64} {
  func.func @_fc_relu_kernel(%arg0: i32, %arg1: memref<128x16xf32, #tpu.memory_space<vmem>>, %arg2: memref<16x128xbf16, #tpu.memory_space<vmem>>, %arg3: memref<1x128xf32, #tpu.memory_space<vmem>>, %arg4: memref<128x128xf32, #tpu.memory_space<vmem>>) attributes {dimension_semantics = [#tpu.dimension_semantics<parallel>], iteration_bounds = array<i64: 1>, scalar_prefetch = 0 : i64, scratch_operands = 0 : i64, tpu.core_type = #tpu.core_type<tc>, window_params = [{transform_indices = @transform_0, window_bounds = array<i64: 128, 16>}, {pipeline_mode = #tpu.pipeline_mode<synchronous>, transform_indices = @transform_1, window_bounds = array<i64: 16, 128>}, {pipeline_mode = #tpu.pipeline_mode<synchronous>, transform_indices = @transform_2, window_bounds = array<i64: 1, 128>}, {transform_indices = @transform_3, window_bounds = array<i64: 128, 128>}]} {
    %c0 = arith.constant 0 : index
    %c0_0 = arith.constant 0 : index
    %0 = vector.load %arg1[%c0, %c0_0] : memref<128x16xf32, #tpu.memory_space<vmem>>, vector<128x16xf32>
    %1 = arith.truncf %0 : vector<128x16xf32> to vector<128x16xbf16>
    %c0_1 = arith.constant 0 : index
    %c0_2 = arith.constant 0 : index
    %2 = vector.load %arg2[%c0_1, %c0_2] : memref<16x128xbf16, #tpu.memory_space<vmem>>, vector<16x128xbf16>
    %cst = arith.constant dense<0.000000e+00> : vector<128x128xf32>
    %3 = tpu.matmul %1, %2, %cst {dimension_numbers = #tpu.dot_dimension_numbers<[1], [0], [0], [1], [0, 0, 1, 1], [], []>} : vector<128x16xbf16>, vector<16x128xbf16>, vector<128x128xf32> -> vector<128x128xf32>
    %c0_3 = arith.constant 0 : index
    %c0_4 = arith.constant 0 : index
    %4 = vector.load %arg3[%c0_3, %c0_4] : memref<1x128xf32, #tpu.memory_space<vmem>>, vector<1x128xf32>
    %5 = vector.broadcast %4 : vector<1x128xf32> to vector<128x128xf32>
    %6 = arith.addf %3, %5 : vector<128x128xf32>
    %cst_5 = arith.constant 0.000000e+00 : f32
    %7 = vector.broadcast %cst_5 : f32 to vector<128x128xf32>
    %8 = arith.maximumf %6, %7 : vector<128x128xf32>
    %c0_6 = arith.constant 0 : index
    %c0_7 = arith.constant 0 : index
    %9 = vector.load %arg4[%c0_6, %c0_7] : memref<128x128xf32, #tpu.memory_space<vmem>>, vector<128x128xf32>
    tpu.vector_store %arg4[%c0_6, %c0_7], %8 {strides = array<i32>} : memref<128x128xf32, #tpu.memory_space<vmem>>, vector<128x128xf32>,
    return
  }
  func.func @transform_0(%arg0: i32) -> (i32, i32) {
    %c0_i32 = arith.constant 0 : i32
    %c0_i32_0 = arith.constant 0 : i32
    return %arg0, %c0_i32 : i32, i32
  }
  func.func @transform_1(%arg0: i32) -> (i32, i32) {
    %c0_i32 = arith.constant 0 : i32
    %c0_i32_0 = arith.constant 0 : i32
    %c0_i32_1 = arith.constant 0 : i32
    return %c0_i32, %c0_i32_0 : i32, i32
  }
  func.func @transform_2(%arg0: i32) -> (i32, i32) {
    %c0_i32 = arith.constant 0 : i32
    %c0_i32_0 = arith.constant 0 : i32
    %c0_i32_1 = arith.constant 0 : i32
    return %c0_i32, %c0_i32_0 : i32, i32
  }
  func.func @transform_3(%arg0: i32) -> (i32, i32) {
    %c0_i32 = arith.constant 0 : i32
    %c0_i32_0 = arith.constant 0 : i32
    return %arg0, %c0_i32 : i32, i32
  }
}

</mosaic_0001>

<llo_original>
// kernel: tpu_custom_call.1
$region0: #{tpu_custom_call.1}
  #allocation0 [shape = 'u32[]', space=smem, size = 0x4, offset = 0x4, fixed_abs, tag = 'smem constant byte address 0x4 - core index']
  #allocation1 [shape = 'u32[72,128]{1,0:T(1,128)}', space=vmem, size = 0x9000, scoped, tag = 'internal scratch']
  %s0 = inlined_call_operand.vmem [shape: f32[128,16], index: 0, kind: input, shape index: {}]
  %s1 = inlined_call_operand.vmem [shape: bf16[16,128], index: 1, kind: input, shape index: {}]
  %s2 = inlined_call_operand.vmem [shape: f32[1,128], index: 2, kind: input, shape index: {}]
  %s3 = inlined_call_operand.hbm [shape: f32[128,128], index: 3, kind: output, shape index: {}]
  %s4 = sld [smem:[#allocation0]]
  $region22: #{tpu_custom_call.1} parent=0
    _
  %s6 = ssub.s32 1, %s4
  %s7 = scalar_select 0, %s6, %s4
  $region1: #{tpu_custom_call.1} parent=0
    #allocation2 [shape = 'u8[65536]{0}', space=vmem, size = 0x10000, scoped, tag = 'output window, operand 0, single buffered']
    #allocation3 [shape = 's32[1]{0}', space=sflag, size = 0x4, scoped, tag = 'scoped memory for tpu_custom_call.1']
    %8 = vsyncpa [#allocation3], 0
    // Predicated region
    $region2: #{tpu_custom_call.1} parent=1 // pred_check
      _
    $region3: #{tpu_custom_call.1} parent=1 // pred_check_branch
      %10 = sbr.rel (0) target = $region5
    $region4: #{tpu_custom_call.1} parent=1 // pred_region
      _
    $region5: #{tpu_custom_call.1} parent=1 // pred_fallthru
      _
    // Predicated region
    $region6: #{tpu_custom_call.1} parent=1 // pred_check
      _
    $region7: #{tpu_custom_call.1} parent=1 // pred_check_branch
      %12 = sbr.rel (0) target = $region9
    $region8: #{tpu_custom_call.1} parent=1 // pred_region
      _
    $region9: #{tpu_custom_call.1} parent=1 // pred_fallthru
      _
    // Predicated region
    $region10: #{tpu_custom_call.1} parent=1 // pred_check
      _
    $region11: #{tpu_custom_call.1} parent=1 // pred_check_branch
      %14 = sbr.rel (0) target = $region13
    $region12: #{tpu_custom_call.1} parent=1 // pred_region
      _
    $region13: #{tpu_custom_call.1} parent=1 // pred_fallthru
      _
    %v16 = vld [vmem:[%s0] sm:$0xff]
    %v17 = vld [vmem:[%s0 + $0x8] sm:$0xff]
    %v18 = vld [vmem:[%s0 + $0x10] sm:$0xff]
    %v19 = vld [vmem:[%s0 + $0x18] sm:$0xff]
    %v20 = vld [vmem:[%s0 + $0x20] sm:$0xff]
    %v21 = vld [vmem:[%s0 + $0x28] sm:$0xff]
    %v22 = vld [vmem:[%s0 + $0x30] sm:$0xff]
    %v23 = vld [vmem:[%s0 + $0x38] sm:$0xff]
    %v24 = vld [vmem:[%s0 + $0x40] sm:$0xff]
    %v25 = vld [vmem:[%s0 + $0x48] sm:$0xff]
    %v26 = vld [vmem:[%s0 + $0x50] sm:$0xff]
    %v27 = vld [vmem:[%s0 + $0x58] sm:$0xff]
    %v28 = vld [vmem:[%s0 + $0x60] sm:$0xff]
    %v29 = vld [vmem:[%s0 + $0x68] sm:$0xff]
    %v30 = vld [vmem:[%s0 + $0x70] sm:$0xff]
    %v31 = vld [vmem:[%s0 + $0x78] sm:$0xff]
    %v32 = vpack.c.bf16 %v17, %v16
    %v33 = vpack.c.bf16 %v19, %v18
    %v34 = vpack.c.bf16 %v21, %v20
    %v35 = vpack.c.bf16 %v23, %v22
    %v36 = vpack.c.bf16 %v25, %v24
    %v37 = vpack.c.bf16 %v27, %v26
    %v38 = vpack.c.bf16 %v29, %v28
    %v39 = vpack.c.bf16 %v31, %v30
    %v40 = vld [vmem:[%s1] sm:$0xf]
    %v41 = vld [vmem:[%s1 + $0x4] sm:$0xf]
    %v42 = vld [vmem:[%s2] sm:$0x1]
    %v44 = vperm.slane %v42, 0
    %v48 = vunpack.c.l.b16 %v40
    %v49 = vunpack.c.l.b16 %v41
    %v50 = vpack.c.b16 %v49, %v48
    %vm52 = vcmask 130048
    %v54 = vsel %vm52, %v32, 0
    %v57 = vsel %vm52, %v33, 0
    %v60 = vsel %vm52, %v34, 0
    %v63 = vsel %vm52, %v35, 0
    %v66 = vsel %vm52, %v36, 0
    %v69 = vsel %vm52, %v37, 0
    %v72 = vsel %vm52, %v38, 0
    %v75 = vsel %vm52, %v39, 0
    %77 = vmatpush.bf16.msra.mxu0 0
    %78 = vmatpush.bf16.msra.mxu0 0
    %79 = vmatpush.bf16.msra.mxu0 0
    %80 = vmatpush.bf16.msra.mxu0 0
    %81 = vmatpush.bf16.msra.mxu0 0
    %82 = vmatpush.bf16.msra.mxu0 0
    %83 = vmatpush.bf16.msra.mxu0 0
    %84 = vmatpush.bf16.msra.mxu0 %v50
    %85 = vmatmul.bf16.gmra.mxu0 %v54
    %v86 = vpop.f32.mrf.mxu0
    %v87 = vadd.f32 %v44, %v86
    %v88 = vpop.f32.mrf.mxu0
    %v89 = vadd.f32 %v44, %v88
    %90 = vmatmul.bf16.gmra.mxu0 %v57
    %v91 = vpop.f32.mrf.mxu0
    %v92 = vadd.f32 %v44, %v91
    %v93 = vpop.f32.mrf.mxu0
    %v94 = vadd.f32 %v44, %v93
    %95 = vmatmul.bf16.gmra.mxu0 %v60
    %v96 = vpop.f32.mrf.mxu0
    %v97 = vadd.f32 %v44, %v96
    %v98 = vpop.f32.mrf.mxu0
    %v99 = vadd.f32 %v44, %v98
    %100 = vmatmul.bf16.gmra.mxu0 %v63
    %v101 = vpop.f32.mrf.mxu0
    %v102 = vadd.f32 %v44, %v101
    %v103 = vpop.f32.mrf.mxu0
    %v104 = vadd.f32 %v44, %v103
    %105 = vmatmul.bf16.gmra.mxu0 %v66
    %v106 = vpop.f32.mrf.mxu0
    %v107 = vadd.f32 %v44, %v106
    %v108 = vpop.f32.mrf.mxu0
    %v109 = vadd.f32 %v44, %v108
    %110 = vmatmul.bf16.gmra.mxu0 %v69
    %v111 = vpop.f32.mrf.mxu0
    %v112 = vadd.f32 %v44, %v111
    %v113 = vpop.f32.mrf.mxu0
    %v114 = vadd.f32 %v44, %v113
    %115 = vmatmul.bf16.gmra.mxu0 %v72
    %v116 = vpop.f32.mrf.mxu0
    %v117 = vadd.f32 %v44, %v116
    %v118 = vpop.f32.mrf.mxu0
    %v119 = vadd.f32 %v44, %v118
    %120 = vmatmul.bf16.gmra.mxu0 %v75
    %v121 = vpop.f32.mrf.mxu0
    %v122 = vadd.f32 %v44, %v121
    %v123 = vpop.f32.mrf.mxu0
    %v124 = vadd.f32 %v44, %v123
    %125 = vdwg.mxu0
    %v126 = vmax.f32 %v87, 0.0
    %v127 = vmax.f32 %v89, 0.0
    %v128 = vmax.f32 %v92, 0.0
    %v129 = vmax.f32 %v94, 0.0
    %v130 = vmax.f32 %v97, 0.0
    %v131 = vmax.f32 %v99, 0.0
    %v132 = vmax.f32 %v102, 0.0
    %v133 = vmax.f32 %v104, 0.0
    %v134 = vmax.f32 %v107, 0.0
    %v135 = vmax.f32 %v109, 0.0
    %v136 = vmax.f32 %v112, 0.0
    %v137 = vmax.f32 %v114, 0.0
    %v138 = vmax.f32 %v117, 0.0
    %v139 = vmax.f32 %v119, 0.0
    %v140 = vmax.f32 %v122, 0.0
    %v141 = vmax.f32 %v124, 0.0
    %142 = vst [vmem:[#allocation2] sm:$0xff] %v126
    %143 = vst [vmem:[#allocation2 + $0x8] sm:$0xff] %v127
    %144 = vst [vmem:[#allocation2 + $0x10] sm:$0xff] %v128
    %145 = vst [vmem:[#allocation2 + $0x18] sm:$0xff] %v129
    %146 = vst [vmem:[#allocation2 + $0x20] sm:$0xff] %v130
    %147 = vst [vmem:[#allocation2 + $0x28] sm:$0xff] %v131
    %148 = vst [vmem:[#allocation2 + $0x30] sm:$0xff] %v132
    %149 = vst [vmem:[#allocation2 + $0x38] sm:$0xff] %v133
    %150 = vst [vmem:[#allocation2 + $0x40] sm:$0xff] %v134
    %151 = vst [vmem:[#allocation2 + $0x48] sm:$0xff] %v135
    %152 = vst [vmem:[#allocation2 + $0x50] sm:$0xff] %v136
    %153 = vst [vmem:[#allocation2 + $0x58] sm:$0xff] %v137
    %154 = vst [vmem:[#allocation2 + $0x60] sm:$0xff] %v138
    %155 = vst [vmem:[#allocation2 + $0x68] sm:$0xff] %v139
    %156 = vst [vmem:[#allocation2 + $0x70] sm:$0xff] %v140
    %157 = vst [vmem:[#allocation2 + $0x78] sm:$0xff] %v141
    // Predicated region
    $region14: #{tpu_custom_call.1} parent=1 // pred_check
      _
    $region15: #{tpu_custom_call.1} parent=1 // pred_check_branch
      %159 = sbr.rel (0) target = $region17
    $region16: #{tpu_custom_call.1} parent=1 // pred_region
      %161 = vsyncadd [#allocation3], 0
      %s162 = sshll.u32 [#allocation2], 4
      %s163 = int_to_ptr.vmem [resolvable:$true] %s162
      %s164 = sshll.u32 %s3, 4
      %s165 = int_to_ptr.hbm [resolvable:$true] %s164
      %170 = dma.vmem_to_hbm [thread:$0]  %s163, 2048, %s165, [#allocation3], 128, 128, 8
    $region17: #{tpu_custom_call.1} parent=1 // pred_fallthru
      _
    // Predicated region
    $region18: #{tpu_custom_call.1} parent=1 // pred_check
      _
    $region19: #{tpu_custom_call.1} parent=1 // pred_check_branch
      %172 = sbr.rel (0) target = $region21
    $region20: #{tpu_custom_call.1} parent=1 // pred_region
      %174 = dma.done [#allocation3], 2048
    $region21: #{tpu_custom_call.1} parent=1 // pred_fallthru
      _
    %175 = vsyncpa [#allocation3], 1

</llo_original>
